<compile_context>
chip_gen: v5e
topology: v5e:2x2
jax: 0.10.0
libtpu: 0.0.40
codegen_flags: <defaults>
</compile_context>

<pallas_src>
import functools

import jax
import jax.numpy as jnp
from jax.experimental import pallas as pl
from jax.experimental.pallas import tpu as pltpu

NEG_SLOPE = 0.2
LANE = 128
# Per-kernel working-set budget (double-buffered blocks + live intermediates),
# kept under the smallest scoped-VMEM default (v5e: 16 MiB).
VMEM_BUDGET_BYTES = 12 * 1024 * 1024


def _round_up(x, m):
    return (x + m - 1) // m * m


def _pick_tile_n(n_pad, ws_fn, budget=VMEM_BUDGET_BYTES):
    """Largest lane-friendly N tile whose estimated working set fits VMEM."""
    for t in (1024, 512, 256, 128):
        if n_pad % t == 0 and ws_fn(t) <= budget:
            return t
    return 128  # n_pad is always a multiple of 128


def _pick_k_chunk(k):
    if k <= 16:
        return k
    for kc in (16, 8, 4, 2):
        if k % kc == 0:
            return kc
    return k


# --------------------------------------------------------------------------- #
# Kernel 1: pairwise scores for knn (per-row top-k-ordering preserving)
# --------------------------------------------------------------------------- #
def _knn_dist_kernel(a_ref, b_ref, bb_ref, out_ref):
    # a_ref: (1, TN, C) channels-last ; b_ref: (1, C, M) channels-first
    # bb_ref: (1, 1, M) precomputed ||b||^2 (padded cols = +1e30)
    a = a_ref[0]
    b = b_ref[0]
    inner = jnp.dot(a, b, preferred_element_type=jnp.float32)      # (TN, M)
    # full pairwise dist = -||a||^2 + 2 a.b - ||b||^2; the -||a||^2 term is a
    # per-row constant and cannot change per-row top-k ordering, so drop it.
    out_ref[0] = 2.0 * inner - bb_ref[0]


# --------------------------------------------------------------------------- #
# Kernel 2: fused edge-feature + conv1(1x1)+BN+LeakyReLU + conv2(...) + max_K
# --------------------------------------------------------------------------- #
def _edge_mlp_kernel(a_ref, nb_ref, w1ad_ref, w1d_ref, b1_ref, w2_ref, b2_ref,
                     out_ref, *, k_chunk, n_chunks):
    # a_ref:  (1, TN, C)     bf16 center-point features
    # nb_ref: (1, K, TN, C)  bf16 gathered neighbor features (K leading)
    # w1ad = W1a - W1d (C,H1), w1d (C,H1), w2 (H1,H2): bf16 (BN folded)
    # b1 (1,H1), b2 (1,H2): f32
    # out_ref: (1, H2, TN)   f32, lane-dense in TN (already PyTorch layout)
    a = a_ref[0]
    tn, c = a.shape
    h1_dim = w1d_ref.shape[1]
    h2_dim = w2_ref.shape[1]

    w1d = w1d_ref[...]
    w2 = w2_ref[...]
    b2 = b2_ref[...]

    # Per-center half of conv1: cat([a, nb-a]) @ W1 == a @ (W1a-W1d) + nb @ W1d
    h_a = jnp.dot(a, w1ad_ref[...], preferred_element_type=jnp.float32)
    h_a = (h_a + b1_ref[...])[None, :, :]                          # (1, TN, H1)

    def chunk_max(ci):
        start = ci * k_chunk
        if not isinstance(start, int):
            start = pl.multiple_of(start, k_chunk)
        nb = nb_ref[0, pl.ds(start, k_chunk), :, :]                 # (KC, TN, C)
        hd = jnp.dot(nb.reshape(k_chunk * tn, c), w1d,
                     preferred_element_type=jnp.float32)
        h1 = hd.reshape(k_chunk, tn, h1_dim) + h_a                  # (KC, TN, H1)
        h1 = jnp.maximum(h1, NEG_SLOPE * h1)                        # LeakyReLU
        h2 = jnp.dot(h1.reshape(k_chunk * tn, h1_dim).astype(w2.dtype), w2,
                     preferred_element_type=jnp.float32)
        h2 = h2.reshape(k_chunk, tn, h2_dim) + b2
        h2 = jnp.maximum(h2, NEG_SLOPE * h2)
        return jnp.max(h2, axis=0)        # VPU maximum over leading (K) axis

    if n_chunks == 1:
        acc = chunk_max(0)
    else:
        acc0 = jnp.full((tn, h2_dim), -jnp.inf, jnp.float32)
        acc = jax.lax.fori_loop(
            0, n_chunks,
            lambda ci, acc: jnp.maximum(acc, chunk_max(ci)),
            acc0, unroll=(n_chunks <= 2))
    out_ref[0] = acc.T                                              # (H2, TN)


# --------------------------------------------------------------------------- #
# Wrapper
# --------------------------------------------------------------------------- #
def edgeconv_forward(a_cn, b_cn, fused_params, k, mxu_dtype=jnp.bfloat16,
                     dist_dtype=jnp.float32):
    """a_cn: (B, C, N), b_cn: (B, C, M)  ->  (B, conv2_channel_out, N)."""
    B, C, N = a_cn.shape
    _, _, M = b_cn.shape
    assert 1 <= k <= M, "embedding_k must be in [1, M]"

    n_pad = _round_up(N, LANE)
    m_pad = _round_up(M, LANE)

    a_nc = jnp.transpose(a_cn, (0, 2, 1)).astype(jnp.float32)      # (B, N, C)
    if n_pad != N:
        a_nc = jnp.pad(a_nc, ((0, 0), (0, n_pad - N), (0, 0)))
    b_cm = b_cn.astype(jnp.float32)                                 # (B, C, M)
    if m_pad != M:
        b_cm = jnp.pad(b_cm, ((0, 0), (0, 0), (0, m_pad - M)))
    # ||b||^2 once per batch; padded columns get +1e30 so top-k never picks them.
    bb = jnp.sum(b_cn.astype(jnp.float32) ** 2, axis=1, keepdims=True)
    if m_pad != M:
        bb = jnp.pad(bb, ((0, 0), (0, 0), (0, m_pad - M)), constant_values=1e30)

    a_dist = a_nc.astype(dist_dtype)
    b_dist = b_cm.astype(dist_dtype)
    dsz = jnp.dtype(dist_dtype).itemsize

    def ws1(tn):  # double-buffered blocks of kernel 1
        return 2 * (tn * C * dsz + C * m_pad * dsz + m_pad * 4 + tn * m_pad * 4)

    tn1 = _pick_tile_n(n_pad, ws1)

    dist = pl.pallas_call(
        _knn_dist_kernel,
        out_shape=jax.ShapeDtypeStruct((B, n_pad, m_pad), jnp.float32),
        grid=(B, n_pad // tn1),
        in_specs=[pl.BlockSpec((1, tn1, C), lambda bi, ni: (bi, ni, 0)),
                  pl.BlockSpec((1, C, m_pad), lambda bi, ni: (bi, 0, 0)),
                  pl.BlockSpec((1, 1, m_pad), lambda bi, ni: (bi, 0, 0))],
        out_specs=pl.BlockSpec((1, tn1, m_pad), lambda bi, ni: (bi, ni, 0)),
        compiler_params=pltpu.CompilerParams(
            dimension_semantics=("parallel", "parallel")),
    )(a_dist, b_dist, bb)

    # TODO(synk): top_k (neighbor selection) and the row gather have no clean
    # Pallas TPU primitive; they stay as plain-JAX glue.  An in-kernel gather
    # from a VMEM-resident (M,C) table would remove the (B,K,N,C) HBM round
    # trip when M*C fits VMEM; left for a follow-up.
    _, idx = jax.lax.top_k(dist, k)                                 # (B, Npad, K)

    # Gather neighbors directly in K-leading layout (B, K, Npad, C), bf16.
    b_nc = jnp.transpose(b_cm, (0, 2, 1)).astype(mxu_dtype)        # (B, Mpad, C)
    idx_kn = jnp.swapaxes(idx, 1, 2).reshape(B, k * n_pad)
    gidx = jnp.broadcast_to(idx_kn[..., None], (B, k * n_pad, C))
    neighbors = jnp.take_along_axis(b_nc, gidx, axis=1).reshape(B, k, n_pad, C)
    a_mx = a_nc.astype(mxu_dtype)

    w1ad, w1d, b1, w2, b2 = fused_params
    H1 = w1d.shape[1]
    H2 = w2.shape[1]

    kc = _pick_k_chunk(k)
    n_chunks = k // kc

    def ws2(tn):  # double-buffered blocks + live intermediates of kernel 2
        io = 2 * (tn * C * 2 + k * tn * C * 2 + H2 * tn * 4)
        wts = 2 * (2 * C * H1 * 2 + H1 * H2 * 2 + (H1 + H2) * 4)
        interm = 2 * kc * tn * (H1 + H2) * 4 + tn * (H1 + H2) * 4
        return io + wts + interm

    tn2 = _pick_tile_n(n_pad, ws2)

    kern = functools.partial(_edge_mlp_kernel, k_chunk=kc, n_chunks=n_chunks)

    out = pl.pallas_call(
        kern,
        out_shape=jax.ShapeDtypeStruct((B, H2, n_pad), jnp.float32),
        grid=(B, n_pad // tn2),
        in_specs=[
            pl.BlockSpec((1, tn2, C), lambda bi, ni: (bi, ni, 0)),
            pl.BlockSpec((1, k, tn2, C), lambda bi, ni: (bi, 0, ni, 0)),
            pl.BlockSpec((C, H1), lambda bi, ni: (0, 0)),
            pl.BlockSpec((C, H1), lambda bi, ni: (0, 0)),
            pl.BlockSpec((1, H1), lambda bi, ni: (0, 0)),
            pl.BlockSpec((H1, H2), lambda bi, ni: (0, 0)),
            pl.BlockSpec((1, H2), lambda bi, ni: (0, 0)),
        ],
        out_specs=pl.BlockSpec((1, H2, tn2), lambda bi, ni: (bi, 0, ni)),
        compiler_params=pltpu.CompilerParams(
            dimension_semantics=("parallel", "parallel")),
    )(a_mx, neighbors, w1ad, w1d, b1, w2, b2)

    return out[:, :, :N]                                            # (B, H2, N)


# --------------------------------------------------------------------------- #
# Deterministic parameter construction (Conv2d 1x1 no-bias + BatchNorm2d, eval)
# --------------------------------------------------------------------------- #
def make_raw_params(key, c1_in, h1, h2):
    ks = jax.random.split(key, 8)
    w1 = 0.1 * jax.random.normal(ks[0], (h1, c1_in), jnp.float32)   # (out, in)
    g1 = 1.0 + 0.1 * jax.random.normal(ks[1], (h1,), jnp.float32)
    be1 = 0.1 * jax.random.normal(ks[2], (h1,), jnp.float32)
    m1 = 0.1 * jax.random.normal(ks[3], (h1,), jnp.float32)
    v1 = 1.0 + 0.1 * jnp.abs(jax.random.normal(ks[4], (h1,), jnp.float32))
    w2 = 0.1 * jax.random.normal(ks[5], (h2, h1), jnp.float32)
    g2 = 1.0 + 0.1 * jax.random.normal(ks[6], (h2,), jnp.float32)
    be2 = 0.1 * jax.random.normal(ks[7], (h2,), jnp.float32)
    m2 = jnp.zeros((h2,), jnp.float32)
    v2 = jnp.ones((h2,), jnp.float32)
    return (w1, g1, be1, m1, v1, w2, g2, be2, m2, v2)


def fuse_params(raw, c_in, eps=1e-5, mxu_dtype=jnp.bfloat16):
    """Fold eval-mode BatchNorm into the (bias-free) 1x1 conv weights and apply
    the algebraic fold  cat([a, nb-a]) @ W1 == a @ (W1a - W1d) + nb @ W1d."""
    w1, g1, be1, m1, v1, w2, g2, be2, m2, v2 = raw
    s1 = g1 / jnp.sqrt(v1 + eps)
    w1t = (w1 * s1[:, None]).T                                      # (2*c_in, H1)
    w1a, w1d = w1t[:c_in], w1t[c_in:]
    b1 = (be1 - m1 * s1)[None, :]
    s2 = g2 / jnp.sqrt(v2 + eps)
    w2t = (w2 * s2[:, None]).T                                      # (H1, H2)
    b2 = (be2 - m2 * s2)[None, :]
    w1ad = w1a - w1d
    return (w1ad.astype(mxu_dtype), w1d.astype(mxu_dtype),
            b1.astype(jnp.float32), w2t.astype(mxu_dtype), b2.astype(jnp.float32))


# --------------------------------------------------------------------------- #
# Pure-JAX reference mirroring the PyTorch forward (BN in eval mode)
# --------------------------------------------------------------------------- #
def reference(a_cn, b_cn, raw, k, eps=1e-5):
    w1, g1, be1, m1, v1, w2, g2, be2, m2, v2 = raw
    a = jnp.transpose(a_cn, (0, 2, 1))
    b = jnp.transpose(b_cn, (0, 2, 1))
    inner = -2.0 * jnp.einsum('bnc,bmc->bnm', a, b,
                              precision=jax.lax.Precision.HIGHEST)
    aa = jnp.sum(a ** 2, axis=2, keepdims=True)
    bb = jnp.sum(b ** 2, axis=2, keepdims=True)
    pd = -aa - inner - jnp.swapaxes(bb, 1, 2)
    _, idx = jax.lax.top_k(pd, k)
    B, N, C = a.shape
    gidx = jnp.broadcast_to(idx.reshape(B, N * k)[..., None], (B, N * k, C))
    nb = jnp.take_along_axis(b, gidx, axis=1).reshape(B, N, k, C)
    diff = nb - a[:, :, None, :]
    a_exp = jnp.broadcast_to(a[:, :, None, :], (B, N, k, C))
    x = jnp.concatenate([a_exp, diff], axis=3)                      # (B, N, K, 2C)
    x = jnp.einsum('bnkc,hc->bnkh', x, w1)
    x = (x - m1) / jnp.sqrt(v1 + eps) * g1 + be1
    x = jnp.where(x > 0, x, 0.2 * x)
    x = jnp.einsum('bnkh,oh->bnko', x, w2)
    x = (x - m2) / jnp.sqrt(v2 + eps) * g2 + be2
    x = jnp.where(x > 0, x, 0.2 * x)
    x = jnp.max(x, axis=2)                                          # (B, N, H2)
    return jnp.transpose(x, (0, 2, 1))                              # (B, H2, N)


if __name__ == "__main__":
    key = jax.random.PRNGKey(0)
    B, C_in, N, M = 2, 4, 16, 16
    K = 8                      # embedding_k
    H1, H2 = 16, 32            # conv1_channel_out, conv2_channel_out
    # conv1_channel_in = 2*C_in = 8, conv2_channel_in = H1 = 16

    k_a, k_b, k_p = jax.random.split(key, 3)
    a_cn = jax.random.normal(k_a, (B, C_in, N), jnp.float32)
    b_cn = jax.random.normal(k_b, (B, C_in, M), jnp.float32)

    raw = make_raw_params(k_p, 2 * C_in, H1, H2)
    fused = fuse_params(raw, C_in)

    out = edgeconv_forward(a_cn, b_cn, fused, K)
    out = jax.block_until_ready(out)
    assert out.shape == (B, H2, N), out.shape

    ref = reference(a_cn, b_cn, raw, K)
    max_err = float(jnp.max(jnp.abs(out - ref)))
    # bf16 MXU operands with f32 accumulation -> widened tolerance vs f32 ref.
    if not bool(jnp.allclose(out, ref, rtol=2e-2, atol=2e-2)):
        raise AssertionError(f"mismatch vs reference, max abs err = {max_err}")

    print("KERNEL_OK")
</pallas_src>

<mosaic_0001>
module attributes {stable_mosaic.version = 11 : i64} {
  func.func @_knn_dist_kernel(%arg0: i32, %arg1: i32, %arg2: memref<1x128x4xf32, #tpu.memory_space<vmem>>, %arg3: memref<1x4x128xf32, #tpu.memory_space<vmem>>, %arg4: memref<1x1x128xf32, #tpu.memory_space<vmem>>, %arg5: memref<1x128x128xf32, #tpu.memory_space<vmem>>) attributes {dimension_semantics = [#tpu.dimension_semantics<parallel>, #tpu.dimension_semantics<parallel>], iteration_bounds = array<i64: 2, 1>, scalar_prefetch = 0 : i64, scratch_operands = 0 : i64, tpu.core_type = #tpu.core_type<tc>, window_params = [{transform_indices = @transform_0, window_bounds = array<i64: 1, 128, 4>}, {transform_indices = @transform_1, window_bounds = array<i64: 1, 4, 128>}, {transform_indices = @transform_2, window_bounds = array<i64: 1, 1, 128>}, {transform_indices = @transform_3, window_bounds = array<i64: 1, 128, 128>}]} {
    %c0 = arith.constant 0 : index
    %c0_0 = arith.constant 0 : index
    %c0_1 = arith.constant 0 : index
    %0 = vector.load %arg2[%c0, %c0_0, %c0_1] : memref<1x128x4xf32, #tpu.memory_space<vmem>>, vector<1x128x4xf32>
    %1 = vector.shape_cast %0 : vector<1x128x4xf32> to vector<128x4xf32>
    %c0_2 = arith.constant 0 : index
    %c0_3 = arith.constant 0 : index
    %c0_4 = arith.constant 0 : index
    %2 = vector.load %arg3[%c0_2, %c0_3, %c0_4] : memref<1x4x128xf32, #tpu.memory_space<vmem>>, vector<1x4x128xf32>
    %3 = vector.shape_cast %2 : vector<1x4x128xf32> to vector<4x128xf32>
    %cst = arith.constant dense<0.000000e+00> : vector<128x128xf32>
    %4 = tpu.matmul %1, %3, %cst {dimension_numbers = #tpu.dot_dimension_numbers<[1], [0], [0], [1], [0, 0, 1, 1], [], []>} : vector<128x4xf32>, vector<4x128xf32>, vector<128x128xf32> -> vector<128x128xf32>
    %cst_5 = arith.constant 2.000000e+00 : f32
    %5 = vector.broadcast %cst_5 : f32 to vector<128x128xf32>
    %6 = arith.mulf %5, %4 : vector<128x128xf32>
    %c0_6 = arith.constant 0 : index
    %c0_7 = arith.constant 0 : index
    %c0_8 = arith.constant 0 : index
    %7 = vector.load %arg4[%c0_6, %c0_7, %c0_8] : memref<1x1x128xf32, #tpu.memory_space<vmem>>, vector<1x1x128xf32>
    %8 = vector.shape_cast %7 : vector<1x1x128xf32> to vector<1x128xf32>
    %9 = vector.broadcast %8 : vector<1x128xf32> to vector<128x128xf32>
    %10 = arith.subf %6, %9 : vector<128x128xf32>
    %c0_9 = arith.constant 0 : index
    %c0_10 = arith.constant 0 : index
    %c0_11 = arith.constant 0 : index
    %11 = vector.load %arg5[%c0_9, %c0_10, %c0_11] : memref<1x128x128xf32, #tpu.memory_space<vmem>>, vector<1x128x128xf32>
    %12 = vector.shape_cast %11 : vector<1x128x128xf32> to vector<128x128xf32>
    %13 = vector.shape_cast %10 : vector<128x128xf32> to vector<1x128x128xf32>
    tpu.vector_store %arg5[%c0_9, %c0_10, %c0_11], %13 {strides = array<i32>} : memref<1x128x128xf32, #tpu.memory_space<vmem>>, vector<1x128x128xf32>,
    return
  }
  func.func @transform_0(%arg0: i32, %arg1: i32) -> (i32, i32, i32) {
    %c0_i32 = arith.constant 0 : i32
    %c0_i32_0 = arith.constant 0 : i32
    return %arg0, %arg1, %c0_i32 : i32, i32, i32
  }
  func.func @transform_1(%arg0: i32, %arg1: i32) -> (i32, i32, i32) {
    %c0_i32 = arith.constant 0 : i32
    %c0_i32_0 = arith.constant 0 : i32
    %c0_i32_1 = arith.constant 0 : i32
    return %arg0, %c0_i32, %c0_i32_0 : i32, i32, i32
  }
  func.func @transform_2(%arg0: i32, %arg1: i32) -> (i32, i32, i32) {
    %c0_i32 = arith.constant 0 : i32
    %c0_i32_0 = arith.constant 0 : i32
    %c0_i32_1 = arith.constant 0 : i32
    return %arg0, %c0_i32, %c0_i32_0 : i32, i32, i32
  }
  func.func @transform_3(%arg0: i32, %arg1: i32) -> (i32, i32, i32) {
    %c0_i32 = arith.constant 0 : i32
    %c0_i32_0 = arith.constant 0 : i32
    return %arg0, %arg1, %c0_i32 : i32, i32, i32
  }
}

</mosaic_0001>

<llo_original>
// kernel: tpu_custom_call.1
$region0: #{tpu_custom_call.1}
  #allocation0 [shape = 'u32[]', space=smem, size = 0x4, offset = 0x4, fixed_abs, tag = 'smem constant byte address 0x4 - core index']
  #allocation1 [shape = 'u32[72,128]{1,0:T(1,128)}', space=vmem, size = 0x9000, scoped, tag = 'internal scratch']
  %s0 = inlined_call_operand.vmem [shape: f32[2,128,4], index: 0, kind: input, shape index: {}]
  %s1 = inlined_call_operand.vmem [shape: f32[2,4,128], index: 1, kind: input, shape index: {}]
  %s2 = inlined_call_operand.vmem [shape: f32[2,1,128], index: 2, kind: input, shape index: {}]
  %s3 = inlined_call_operand.hbm [shape: f32[2,128,128], index: 3, kind: output, shape index: {}]
  %s4 = sld [smem:[#allocation0]]
  $region45: #{tpu_custom_call.1} parent=0
    _
  %s6 = ssub.s32 1, %s4
  %s7 = scalar_select 0, %s6, %s4
  $region1: #{tpu_custom_call.1} parent=0
    #allocation2 [shape = 'u8[131072]{0}', space=vmem, size = 0x20000, scoped, tag = 'output window, operand 0']
    #allocation3 [shape = 's32[2]{0}', space=sflag, size = 0x8, scoped, tag = 'scoped memory for tpu_custom_call.1']
    %8 = vsyncpa [#allocation3], 0
    %s9 = scalar_lea.sflag [#allocation3], 1
    %10 = vsyncpa %s9, 0
    loop: start=0, step=1, limit=4
    $region2: #{tpu_custom_call.1} parent=1 // loop_pre_header
      _
    $region3: #{tpu_custom_call.1} parent=1 // loop_header
      %s12 = sphi 0, %s16
      %p13 = scmp.ge.s32.totalorder %s12, 4
      %s19 = sphi 0, %s31
      %s20 = sphi 0, %s27
      %s21 = sphi 0, %s19
      %s22 = sphi 0, %s20
      %s23 = sphi 0, %s21
      %s24 = sphi 0, %s22
      %s36 = sphi 0, %s38
      %s39 = sphi 0, %s36
      %s40 = sphi 0, %s39
      %s56 = sphi 0, %s40
      %s62 = sphi 0, %s64
      %s65 = sphi 0, %s62
      %s66 = sphi 0, %s65
      %s82 = sphi 0, %s66
      %s88 = sphi 0, %s90
      %s91 = sphi 0, %s88
      %s92 = sphi 0, %s91
      %s108 = sphi 0, %s92
      %s116 = sphi 0, %s118
      %s119 = sphi 0, %s116
      %s120 = sphi 0, %s119
      %s136 = sphi 0, %s120
    $region4: #{tpu_custom_call.1} parent=1 // loop_header_branch
      %15 = sbr.rel (%p13) target = $region8
    $region5: #{tpu_custom_call.1} parent=1 // loop_body
      %s17 = ssub.s32 %s12, 1
      %s18 = ssub.s32 %s12, 2
      %s25 = sadd.s32 1, %s20
      %p26 = scmp.ge.s32.totalorder %s25, 1
      %s27 = scalar_select %p26, 0, %s25
      %s28 = sadd.s32 1, %s19
      %s29 = scalar_select %p26, %s28, %s19
      %p30 = scmp.ge.s32.totalorder %s29, 2
      %s31 = scalar_select %p30, 0, %s29
      %s32 = ssub.s32 %s19, %s31
      %s33 = ssub.s32 %s20, %s27
      %s34 = sor.u32 %s32, %s33
      %p35 = scmp.eq.s32.totalorder %s34, 0
      %s37 = sadd.s32 %s36, 1
      %s38 = scalar_select %p35, %s36, %s37
      %p41 = pneg %p35
      %p42 = scmp.eq.s32.totalorder %s12, 1
      %p43 = por %p41, %p42
      %p44 = scmp.ne.s32.totalorder %s36, %s39
      %p45 = scmp.eq.s32.totalorder %s12, 0
      %p46 = por %p44, %p45
      %p47 = scmp.ne.s32.totalorder %s36, %s39
      %p48 = scmp.eq.s32.totalorder %s17, 1
      %p49 = por %p47, %p48
      %p50 = scmp.ne.s32.totalorder %s39, %s40
      %p51 = scmp.eq.s32.totalorder %s17, 0
      %p52 = por %p50, %p51
      %p53 = scmp.ne.s32.totalorder %s39, %s40
      %p54 = scmp.eq.s32.totalorder %s18, 1
      %p55 = por %p53, %p54
      %p57 = scmp.ne.s32.totalorder %s40, %s56
      %p58 = scmp.eq.s32.totalorder %s18, 0
      %p59 = por %p57, %p58
      %s60 = ssub.s32 %s19, %s31
      %p61 = scmp.eq.s32.totalorder %s60, 0
      %s63 = sadd.s32 %s62, 1
      %s64 = scalar_select %p61, %s62, %s63
      %p67 = pneg %p61
      %p68 = scmp.eq.s32.totalorder %s12, 1
      %p69 = por %p67, %p68
      %p70 = scmp.ne.s32.totalorder %s62, %s65
      %p71 = scmp.eq.s32.totalorder %s12, 0
      %p72 = por %p70, %p71
      %p73 = scmp.ne.s32.totalorder %s62, %s65
      %p74 = scmp.eq.s32.totalorder %s17, 1
      %p75 = por %p73, %p74
      %p76 = scmp.ne.s32.totalorder %s65, %s66
      %p77 = scmp.eq.s32.totalorder %s17, 0
      %p78 = por %p76, %p77
      %p79 = scmp.ne.s32.totalorder %s65, %s66
      %p80 = scmp.eq.s32.totalorder %s18, 1
      %p81 = por %p79, %p80
      %p83 = scmp.ne.s32.totalorder %s66, %s82
      %p84 = scmp.eq.s32.totalorder %s18, 0
      %p85 = por %p83, %p84
      %s86 = ssub.s32 %s19, %s31
      %p87 = scmp.eq.s32.totalorder %s86, 0
      %s89 = sadd.s32 %s88, 1
      %s90 = scalar_select %p87, %s88, %s89
      %p93 = pneg %p87
      %p94 = scmp.eq.s32.totalorder %s12, 1
      %p95 = por %p93, %p94
      %p96 = scmp.ne.s32.totalorder %s88, %s91
      %p97 = scmp.eq.s32.totalorder %s12, 0
      %p98 = por %p96, %p97
      %p99 = scmp.ne.s32.totalorder %s88, %s91
      %p100 = scmp.eq.s32.totalorder %s17, 1
      %p101 = por %p99, %p100
      %p102 = scmp.ne.s32.totalorder %s91, %s92
      %p103 = scmp.eq.s32.totalorder %s17, 0
      %p104 = por %p102, %p103
      %p105 = scmp.ne.s32.totalorder %s91, %s92
      %p106 = scmp.eq.s32.totalorder %s18, 1
      %p107 = por %p105, %p106
      %p109 = scmp.ne.s32.totalorder %s92, %s108
      %p110 = scmp.eq.s32.totalorder %s18, 0
      %p111 = por %p109, %p110
      %s112 = ssub.s32 %s19, %s31
      %s113 = ssub.s32 %s20, %s27
      %s114 = sor.u32 %s112, %s113
      %p115 = scmp.eq.s32.totalorder %s114, 0
      %s117 = sadd.s32 %s116, 1
      %s118 = scalar_select %p115, %s116, %s117
      %p121 = pneg %p115
      %p122 = scmp.eq.s32.totalorder %s12, 1
      %p123 = por %p121, %p122
      %p124 = scmp.ne.s32.totalorder %s116, %s119
      %p125 = scmp.eq.s32.totalorder %s12, 0
      %p126 = por %p124, %p125
      %p127 = scmp.ne.s32.totalorder %s116, %s119
      %p128 = scmp.eq.s32.totalorder %s17, 1
      %p129 = por %p127, %p128
      %p130 = scmp.ne.s32.totalorder %s119, %s120
      %p131 = scmp.eq.s32.totalorder %s17, 0
      %p132 = por %p130, %p131
      %p133 = scmp.ne.s32.totalorder %s119, %s120
      %p134 = scmp.eq.s32.totalorder %s18, 1
      %p135 = por %p133, %p134
      %p137 = scmp.ne.s32.totalorder %s120, %s136
      %p138 = scmp.eq.s32.totalorder %s18, 0
      %p139 = por %p137, %p138
      %p140 = scmp.le.s32.totalorder 1, %s12
      %p141 = scmp.lt.s32.totalorder %s12, 3
      %p142 = pnand %p140, %p141
      %p143 = pneg %p142
      // Predicated region
      $region9: #{tpu_custom_call.1} parent=5 // pred_check
        _
      $region10: #{tpu_custom_call.1} parent=5 // pred_check_branch
        %145 = sbr.rel (%p142) target = $region12
      $region11: #{tpu_custom_call.1} parent=5 // pred_region
        %s146 = ssub.s32 %s12, 1
      $region12: #{tpu_custom_call.1} parent=5 // pred_fallthru
        _
      %p147 = scmp.lt.s32.totalorder %s12, 2
      // Predicated region
      $region13: #{tpu_custom_call.1} parent=5 // pred_check
        %p148 = pneg %p147
      $region14: #{tpu_custom_call.1} parent=5 // pred_check_branch
        %150 = sbr.rel (%p148) target = $region16
      $region15: #{tpu_custom_call.1} parent=5 // pred_region
        // Predicated region
        $region17: #{tpu_custom_call.1} parent=15 // pred_check
          %p151 = pneg %p46
        $region18: #{tpu_custom_call.1} parent=15 // pred_check_branch
          %153 = sbr.rel (%p151) target = $region20
        $region19: #{tpu_custom_call.1} parent=15 // pred_region
          %s154 = smul.u32 16, %s20
          %p155 = scmp.lt.s32.totalorder %s19, 1
          %s156 = scalar_select %p155, %s19, 1
          %p157 = scmp.lt.s32.totalorder %s154, 15
          %s158 = scalar_select %p157, %s154, 15
          %s159 = smul.addr %s156, 16
          %s160 = sadd.s32 %s158, %s159
          %s161 = smul.addr %s160, 8
          %s162 = scalar_lea.vmem %s0, %s161
          %s163 = smul.u32 16, %s20
        $region20: #{tpu_custom_call.1} parent=15 // pred_fallthru
          _
        // Predicated region
        $region21: #{tpu_custom_call.1} parent=15 // pred_check
          %p164 = pneg %p72
        $region22: #{tpu_custom_call.1} parent=15 // pred_check_branch
          %166 = sbr.rel (%p164) target = $region24
        $region23: #{tpu_custom_call.1} parent=15 // pred_region
          %p167 = scmp.lt.s32.totalorder %s19, 1
          %s168 = scalar_select %p167, %s19, 1
          %s169 = smul.addr %s168, 4
          %s170 = scalar_lea.vmem %s1, %s169
        $region24: #{tpu_custom_call.1} parent=15 // pred_fallthru
          _
        // Predicated region
        $region25: #{tpu_custom_call.1} parent=15 // pred_check
          %p171 = pneg %p98
        $region26: #{tpu_custom_call.1} parent=15 // pred_check_branch
          %173 = sbr.rel (%p171) target = $region28
        $region27: #{tpu_custom_call.1} parent=15 // pred_region
          %p174 = scmp.lt.s32.totalorder %s19, 1
          %s175 = scalar_select %p174, %s19, 1
          %s176 = scalar_lea.vmem %s2, %s175
        $region28: #{tpu_custom_call.1} parent=15 // pred_fallthru
          _
      $region16: #{tpu_custom_call.1} parent=5 // pred_fallthru
        _
      %p177 = scmp.le.s32.totalorder 1, %s12
      %p178 = scmp.lt.s32.totalorder %s12, 3
      %p179 = pnand %p177, %p178
      %p180 = pneg %p179
      // Predicated region
      $region29: #{tpu_custom_call.1} parent=5 // pred_check
        _
      $region30: #{tpu_custom_call.1} parent=5 // pred_check_branch
        %182 = sbr.rel (%p179) target = $region32
      $region31: #{tpu_custom_call.1} parent=5 // pred_region
        %s183 = ssub.s32 %s12, 1
        %s184 = smul.u32 16, %s22
        %p185 = scmp.lt.s32.totalorder %s21, 1
        %s186 = scalar_select %p185, %s21, 1
        %p187 = scmp.lt.s32.totalorder %s184, 15
        %s188 = scalar_select %p187, %s184, 15
        %s189 = smul.addr %s186, 16
        %s190 = sadd.s32 %s188, %s189
        %s191 = smul.addr %s190, 8
        %s192 = scalar_lea.vmem %s0, %s191
        %p193 = pneg %p52
        %p194 = pneg %p49
        %p195 = scmp.lt.s32.totalorder %s21, 1
        %s196 = scalar_select %p195, %s21, 1
        %s197 = smul.addr %s196, 4
        %s198 = scalar_lea.vmem %s1, %s197
        %p199 = pneg %p78
        %p200 = pneg %p75
        %p201 = scmp.lt.s32.totalorder %s21, 1
        %s202 = scalar_select %p201, %s21, 1
        %s203 = scalar_lea.vmem %s2, %s202
        %p204 = pneg %p104
        %p205 = pneg %p101
        %p206 = pneg %p132
        %p207 = pneg %p129
        %s208 = sand.u32 %s119, 1
        %s209 = scalar_lea.sflag [#allocation3], %s208
        %s210 = sand.u32 %s119, 1
        %s211 = smul.addr %s210, 128
        %s212 = scalar_lea.vmem [#allocation2], %s211
        %s213 = smul.u32 16, %s22
        %p214 = scmp.lt.s32.totalorder %s21, 1
        %s215 = scalar_select %p214, %s21, 1
        %p216 = scmp.lt.s32.totalorder %s213, 15
        %s217 = scalar_select %p216, %s213, 15
        %s218 = smul.addr %s215, 16
        %s219 = sadd.s32 %s217, %s218
        %s220 = smul.addr %s219, 8
        %s221 = scalar_lea.vmem %s0, %s220
        %s222 = smul.u32 16, %s22
        %p223 = scmp.lt.s32.totalorder %s21, 1
        %s224 = scalar_select %p223, %s21, 1
        %s225 = smul.addr %s224, 4
        %s226 = scalar_lea.vmem %s1, %s225
        %p227 = scmp.lt.s32.totalorder %s21, 1
        %s228 = scalar_select %p227, %s21, 1
        %s229 = scalar_lea.vmem %s2, %s228
        %s230 = smul.u32 16, %s22
        %v231 = vld [vmem:[%s221] sm:$0xff]
        %v232 = vld [vmem:[%s221 + $0x8] sm:$0xff]
        %v233 = vld [vmem:[%s221 + $0x10] sm:$0xff]
        %v234 = vld [vmem:[%s221 + $0x18] sm:$0xff]
        %v235 = vld [vmem:[%s221 + $0x20] sm:$0xff]
        %v236 = vld [vmem:[%s221 + $0x28] sm:$0xff]
        %v237 = vld [vmem:[%s221 + $0x30] sm:$0xff]
        %v238 = vld [vmem:[%s221 + $0x38] sm:$0xff]
        %v239 = vld [vmem:[%s221 + $0x40] sm:$0xff]
        %v240 = vld [vmem:[%s221 + $0x48] sm:$0xff]
        %v241 = vld [vmem:[%s221 + $0x50] sm:$0xff]
        %v242 = vld [vmem:[%s221 + $0x58] sm:$0xff]
        %v243 = vld [vmem:[%s221 + $0x60] sm:$0xff]
        %v244 = vld [vmem:[%s221 + $0x68] sm:$0xff]
        %v245 = vld [vmem:[%s221 + $0x70] sm:$0xff]
        %v246 = vld [vmem:[%s221 + $0x78] sm:$0xff]
        %v247 = vld [vmem:[%s226] sm:$0xf]
        %vm248 = vcmask 31744
        %v250 = vsel %vm248, %v231, 0
        %v253 = vsel %vm248, %v232, 0
        %v256 = vsel %vm248, %v233, 0
        %v259 = vsel %vm248, %v234, 0
        %v262 = vsel %vm248, %v235, 0
        %v265 = vsel %vm248, %v236, 0
        %v268 = vsel %vm248, %v237, 0
        %v271 = vsel %vm248, %v238, 0
        %v274 = vsel %vm248, %v239, 0
        %v277 = vsel %vm248, %v240, 0
        %v280 = vsel %vm248, %v241, 0
        %v283 = vsel %vm248, %v242, 0
        %v286 = vsel %vm248, %v243, 0
        %v289 = vsel %vm248, %v244, 0
        %v292 = vsel %vm248, %v245, 0
        %v295 = vsel %vm248, %v246, 0
        %vm297 = vcmask 1043456
        %v299 = vsel %vm297, %v247, 0
        %301 = vmatpush.msra.mxu0 0.0
        %302 = vmatpush.msra.mxu0 0.0
        %303 = vmatpush.msra.mxu0 0.0
        %304 = vmatpush.msra.mxu0 0.0
        %305 = vmatpush.msra.mxu0 0.0
        %306 = vmatpush.msra.mxu0 0.0
        %307 = vmatpush.msra.mxu0 0.0
        %308 = vmatpush.msra.mxu0 0.0
        %309 = vmatpush.msra.mxu0 0.0
        %310 = vmatpush.msra.mxu0 0.0
        %311 = vmatpush.msra.mxu0 0.0
        %312 = vmatpush.msra.mxu0 0.0
        %313 = vmatpush.msra.mxu0 0.0
        %314 = vmatpush.msra.mxu0 0.0
        %315 = vmatpush.msra.mxu0 0.0
        %316 = vmatpush.msra.mxu0 %v299
        %317 = vmatmul.f32.gmra.mxu0 %v250
        %v318 = vpop.f32.mrf.mxu0
        %v319 = vadd.f32 0.0, %v318
        %320 = vmatmul.f32.gmra.mxu0 %v253
        %v321 = vpop.f32.mrf.mxu0
        %v322 = vadd.f32 0.0, %v321
        %323 = vmatmul.f32.gmra.mxu0 %v256
        %v324 = vpop.f32.mrf.mxu0
        %v325 = vadd.f32 0.0, %v324
        %326 = vmatmul.f32.gmra.mxu0 %v259
        %v327 = vpop.f32.mrf.mxu0
        %v328 = vadd.f32 0.0, %v327
        %329 = vmatmul.f32.gmra.mxu0 %v262
        %v330 = vpop.f32.mrf.mxu0
        %v331 = vadd.f32 0.0, %v330
        %332 = vmatmul.f32.gmra.mxu0 %v265
        %v333 = vpop.f32.mrf.mxu0
        %v334 = vadd.f32 0.0, %v333
        %335 = vmatmul.f32.gmra.mxu0 %v268
        %v336 = vpop.f32.mrf.mxu0
        %v337 = vadd.f32 0.0, %v336
        %338 = vmatmul.f32.gmra.mxu0 %v271
        %v339 = vpop.f32.mrf.mxu0
        %v340 = vadd.f32 0.0, %v339
        %341 = vmatmul.f32.gmra.mxu0 %v274
        %v342 = vpop.f32.mrf.mxu0
        %v343 = vadd.f32 0.0, %v342
        %344 = vmatmul.f32.gmra.mxu0 %v277
        %v345 = vpop.f32.mrf.mxu0
        %v346 = vadd.f32 0.0, %v345
        %347 = vmatmul.f32.gmra.mxu0 %v280
        %v348 = vpop.f32.mrf.mxu0
        %v349 = vadd.f32 0.0, %v348
        %350 = vmatmul.f32.gmra.mxu0 %v283
        %v351 = vpop.f32.mrf.mxu0
        %v352 = vadd.f32 0.0, %v351
        %353 = vmatmul.f32.gmra.mxu0 %v286
        %v354 = vpop.f32.mrf.mxu0
        %v355 = vadd.f32 0.0, %v354
        %356 = vmatmul.f32.gmra.mxu0 %v289
        %v357 = vpop.f32.mrf.mxu0
        %v358 = vadd.f32 0.0, %v357
        %359 = vmatmul.f32.gmra.mxu0 %v292
        %v360 = vpop.f32.mrf.mxu0
        %v361 = vadd.f32 0.0, %v360
        %362 = vmatmul.f32.gmra.mxu0 %v295
        %v363 = vpop.f32.mrf.mxu0
        %v364 = vadd.f32 0.0, %v363
        %365 = vdwg.mxu0
        %v366 = vmul.f32 %v319, 2.0
        %v367 = vmul.f32 %v322, 2.0
        %v368 = vmul.f32 %v325, 2.0
        %v369 = vmul.f32 %v328, 2.0
        %v370 = vmul.f32 %v331, 2.0
        %v371 = vmul.f32 %v334, 2.0
        %v372 = vmul.f32 %v337, 2.0
        %v373 = vmul.f32 %v340, 2.0
        %v374 = vmul.f32 %v343, 2.0
        %v375 = vmul.f32 %v346, 2.0
        %v376 = vmul.f32 %v349, 2.0
        %v377 = vmul.f32 %v352, 2.0
        %v378 = vmul.f32 %v355, 2.0
        %v379 = vmul.f32 %v358, 2.0
        %v380 = vmul.f32 %v361, 2.0
        %v381 = vmul.f32 %v364, 2.0
        %v382 = vld [vmem:[%s229] sm:$0x1]
        %v384 = vperm.slane %v382, 0
        %v386 = vsub.f32 %v366, %v384
        %v387 = vsub.f32 %v367, %v384
        %v388 = vsub.f32 %v368, %v384
        %v389 = vsub.f32 %v369, %v384
        %v390 = vsub.f32 %v370, %v384
        %v391 = vsub.f32 %v371, %v384
        %v392 = vsub.f32 %v372, %v384
        %v393 = vsub.f32 %v373, %v384
        %v394 = vsub.f32 %v374, %v384
        %v395 = vsub.f32 %v375, %v384
        %v396 = vsub.f32 %v376, %v384
        %v397 = vsub.f32 %v377, %v384
        %v398 = vsub.f32 %v378, %v384
        %v399 = vsub.f32 %v379, %v384
        %v400 = vsub.f32 %v380, %v384
        %v401 = vsub.f32 %v381, %v384
        %402 = vst [vmem:[%s212] sm:$0xff] %v386
        %403 = vst [vmem:[%s212 + $0x8] sm:$0xff] %v387
        %404 = vst [vmem:[%s212 + $0x10] sm:$0xff] %v388
        %405 = vst [vmem:[%s212 + $0x18] sm:$0xff] %v389
        %406 = vst [vmem:[%s212 + $0x20] sm:$0xff] %v390
        %407 = vst [vmem:[%s212 + $0x28] sm:$0xff] %v391
        %408 = vst [vmem:[%s212 + $0x30] sm:$0xff] %v392
        %409 = vst [vmem:[%s212 + $0x38] sm:$0xff] %v393
        %410 = vst [vmem:[%s212 + $0x40] sm:$0xff] %v394
        %411 = vst [vmem:[%s212 + $0x48] sm:$0xff] %v395
        %412 = vst [vmem:[%s212 + $0x50] sm:$0xff] %v396
        %413 = vst [vmem:[%s212 + $0x58] sm:$0xff] %v397
        %414 = vst [vmem:[%s212 + $0x60] sm:$0xff] %v398
        %415 = vst [vmem:[%s212 + $0x68] sm:$0xff] %v399
        %416 = vst [vmem:[%s212 + $0x70] sm:$0xff] %v400
        %417 = vst [vmem:[%s212 + $0x78] sm:$0xff] %v401
        %s418 = sand.u32 %s119, 1
        %s419 = scalar_lea.sflag [#allocation3], %s418
        %s420 = sand.u32 %s119, 1
        %s421 = smul.addr %s420, 128
        %s422 = scalar_lea.vmem [#allocation2], %s421
        // Predicated region
        $region33: #{tpu_custom_call.1} parent=31 // pred_check
          %p423 = pneg %p129
        $region34: #{tpu_custom_call.1} parent=31 // pred_check_branch
          %425 = sbr.rel (%p423) target = $region36
        $region35: #{tpu_custom_call.1} parent=31 // pred_region
          %s426 = smul.u32 16, %s22
          %428 = vsyncadd %s419, 0
          %s429 = smul.addr %s21, 16
          %s430 = sadd.s32 %s426, %s429
          %s431 = smul.addr %s430, 8
          %s432 = scalar_lea.hbm %s3, %s431
          %s433 = sshll.u32 %s422, 4
          %s434 = int_to_ptr.vmem [resolvable:$true] %s433
          %s435 = sshll.u32 %s432, 4
          %s436 = int_to_ptr.hbm [resolvable:$true] %s435
          %441 = dma.vmem_to_hbm [thread:$0]  %s434, 2048, %s436, %s419, 128, 128, 8
        $region36: #{tpu_custom_call.1} parent=31 // pred_fallthru
          _
      $region32: #{tpu_custom_call.1} parent=5 // pred_fallthru
        _
      %p442 = scmp.le.s32.totalorder 2, %s12
      // Predicated region
      $region37: #{tpu_custom_call.1} parent=5 // pred_check
        %p443 = pneg %p442
      $region38: #{tpu_custom_call.1} parent=5 // pred_check_branch
        %445 = sbr.rel (%p443) target = $region40
      $region39: #{tpu_custom_call.1} parent=5 // pred_region
        %s446 = ssub.s32 %s12, 2
        // Predicated region
        $region41: #{tpu_custom_call.1} parent=39 // pred_check
          %p447 = pneg %p135
        $region42: #{tpu_custom_call.1} parent=39 // pred_check_branch
          %449 = sbr.rel (%p447) target = $region44
        $region43: #{tpu_custom_call.1} parent=39 // pred_region
          %s450 = sand.u32 %s120, 1
          %s451 = scalar_lea.sflag [#allocation3], %s450
          %s452 = sand.u32 %s120, 1
          %s453 = smul.addr %s452, 128
          %s454 = scalar_lea.vmem [#allocation2], %s453
          %456 = dma.done %s451, 2048
        $region44: #{tpu_custom_call.1} parent=39 // pred_fallthru
          _
      $region40: #{tpu_custom_call.1} parent=5 // pred_fallthru
        _
    $region6: #{tpu_custom_call.1} parent=1 // loop_footer
      %s16 = sadd.s32 1, %s12
    $region7: #{tpu_custom_call.1} parent=1 // loop_footer_branch
      %11 = sbr.rel target = $region3
    $region8: #{tpu_custom_call.1} parent=1 // loop_exit
      _
    %457 = vsyncpa [#allocation3], 1
    %s458 = scalar_lea.sflag [#allocation3], 1
    %459 = vsyncpa %s458, 1

</llo_original>
